<compile_context>
chip_gen: v6e
topology: v6e:2x2x1
jax: 0.10.0
libtpu: 0.0.40
codegen_flags: <defaults>
</compile_context>

<pallas_src>
import jax
import jax.numpy as jnp
import numpy as np
from jax import lax
from jax.experimental import pallas as pl
from jax.experimental.pallas import tpu as pltpu


def _basic_block_kernel(x_ref, w1_ref, b1_ref, w2_ref, b2_ref, o_ref):
    """Fused BasicBlock forward for one tile of Nb images.

    x_ref  : (Nb, H, W*C)     f32  lane-dense input rows (also the residual)
    w1_ref : (3*W*C, W*C)     bf16 conv1 weights, ky folded into K, bn1 scale folded in
    b1_ref : (1, W*C)         f32  folded bn1 bias (tiled over W)
    w2_ref : (3*W*C, W*C)     bf16 conv2 weights (bn2 scale folded in)
    b2_ref : (1, W*C)         f32  folded bn2 bias
    o_ref  : (Nb, H, W*C)     f32  output rows
    """
    nb, H, WC = x_ref.shape
    K = 3 * WC

    x = x_ref[...]                                        # (Nb, H, WC) f32

    def k_folded_operand(act):
        """(Nb, H, WC) f32 -> (Nb*H, 3*WC) bf16 MXU operand.

        Row y holds [pad[y], pad[y+1], pad[y+2]] concatenated along lanes,
        where pad is the activation with one zero halo row above and below
        (per image).  W-edge padding and dx taps live in the weight matrix.
        """
        zero = jnp.zeros((nb, 1, WC), jnp.float32)
        p = jnp.concatenate([zero, act, zero], axis=1)    # (Nb, H+2, WC)
        op = jnp.concatenate(
            [p[:, 0:H, :], p[:, 1:H + 1, :], p[:, 2:H + 2, :]], axis=2)
        return op.reshape(nb * H, K).astype(jnp.bfloat16)

    # ---- conv1 (+ bn1 scale folded into w1) : one MXU matmul, M = Nb*H ----
    acc1 = jnp.dot(k_folded_operand(x), w1_ref[...],
                   preferred_element_type=jnp.float32)    # (Nb*H, WC) f32
    out1 = jnp.maximum(acc1 + b1_ref[...], 0.0)           # bn1 bias + relu

    # ---- conv2 (+ bn2 scale folded into w2) ----
    acc2 = jnp.dot(k_folded_operand(out1.reshape(nb, H, WC)), w2_ref[...],
                   preferred_element_type=jnp.float32)    # (Nb*H, WC) f32

    # ---- bn2 bias + residual add + relu, lane-dense store ----
    out2 = acc2 + b2_ref[...] + x.reshape(nb * H, WC)
    o_ref[...] = jnp.maximum(out2, 0.0).reshape(nb, H, WC)


def _fold_bn(gamma, beta, mean, var, eps=1e-5):
    scale = gamma * lax.rsqrt(var + eps)
    bias = beta - mean * scale
    return scale, bias


def _build_big_conv_weights(w_oihw, width):
    """OIHW 3x3 weights -> (3*W*Cin, W*Cout) bf16 matrix with ky folded into K.

    Wbig[ky*W*Cin + x*Cin + ci, x2*Cout + co] = w[co, ci, ky, kx], kx = x - x2 + 1
    (zero when |x - x2| > 1), so a 3x3/s1/p1 conv over lane-dense (rows, W*C)
    becomes  out = op @ Wbig  with op rows = [padH[y], padH[y+1], padH[y+2]].
    Fold the BN scale into w_oihw (scale the Cout axis) before calling.
    NOTE: this block-tridiagonal scheme is a good trade only for W*C <= ~512;
    real ResNet stage widths should switch to K = 9*Cin tiling over NHWC rows.
    """
    cout, cin = w_oihw.shape[0], w_oihw.shape[1]
    mats = []
    for ky in range(3):
        acc = jnp.zeros((width * cin, width * cout), jnp.float32)
        for kx in range(3):
            shift = jnp.eye(width, k=1 - kx, dtype=jnp.float32)   # x2 == x + (1 - kx)
            block = jnp.transpose(w_oihw[:, :, ky, kx])           # (Cin, Cout)
            acc = acc + jnp.kron(shift, block)
        mats.append(acc)
    return jnp.concatenate(mats, axis=0).astype(jnp.bfloat16)     # (3*W*Cin, W*Cout)


def _pick_image_tile(n, h, m_cap=256, min_steps=8):
    """Largest divisor Nb of n with Nb*h <= m_cap (vreg budget) while keeping
    at least min_steps grid steps (so each v7x TensorCore gets several steps
    to overlap DMA with compute)."""
    best = 1
    for d in range(1, n + 1):
        if n % d != 0:
            continue
        if d * h > m_cap:
            continue
        if n // d < min(n, min_steps):
            continue
        best = d
    return best


def basic_block_forward(x_nchw, params):
    """Wrapper: NCHW in -> NCHW out; all hot-path compute inside the Pallas kernel."""
    w1 = params["w1"]          # (Cout, Cin, 3, 3), torch OIHW layout
    w2 = params["w2"]          # (Cout, Cout, 3, 3)
    s1, b1 = _fold_bn(params["g1"], params["be1"], params["m1"], params["v1"])
    s2, b2 = _fold_bn(params["g2"], params["be2"], params["m2"], params["v2"])

    N, Cin, H, W = x_nchw.shape
    Cout = w1.shape[0]
    assert Cin == Cout, "BasicBlock residual with downsample=None requires inplanes == planes"
    WC = W * Cout
    assert WC % 128 == 0, "lane-dense layout requires W*C to be a multiple of 128"

    nb = _pick_image_tile(N, H)

    # NCHW -> lane-dense (N, H, W*C) rows.
    # TODO(synk): accepting/returning NHWC (or lane-dense rows) directly would
    # remove these two extra HBM transpose passes; kept for NCHW interface parity.
    x_rows = jnp.transpose(x_nchw, (0, 2, 3, 1)).reshape(N, H, WC).astype(jnp.float32)

    # Fold BN scale into the conv weights (scale the Cout axis before bf16 cast).
    w1_big = _build_big_conv_weights(w1 * s1[:, None, None, None], W)   # (3*WC, WC) bf16
    w2_big = _build_big_conv_weights(w2 * s2[:, None, None, None], W)
    b1_t = jnp.tile(b1, W).reshape(1, WC).astype(jnp.float32)
    b2_t = jnp.tile(b2, W).reshape(1, WC).astype(jnp.float32)

    # Honest VMEM budget (double-buffered blocks + weights + in-kernel temporaries),
    # with 2x headroom, floored at 16 MiB and capped below v7x's 64 MiB physical VMEM.
    act_block = nb * H * WC * 4
    w_bytes = 2 * (3 * WC * WC * 2)
    bias_bytes = 2 * (WC * 4)
    tmp_bytes = 4 * nb * H * 3 * WC * 4
    est = 4 * act_block + 2 * w_bytes + 2 * bias_bytes + tmp_bytes
    vmem_limit = int(min(64 << 20, max(16 << 20, 2 * est)))

    # TODO(synk): weights/biases have constant index_maps and could be single-
    # buffered via pipeline_mode=pl.Buffered(1); footprint here is tiny, skipped.
    out_rows = pl.pallas_call(
        _basic_block_kernel,
        out_shape=jax.ShapeDtypeStruct((N, H, WC), jnp.float32),
        grid_spec=pltpu.PrefetchScalarGridSpec(
            num_scalar_prefetch=0,
            grid=(N // nb,),
            in_specs=[
                pl.BlockSpec((nb, H, WC), lambda g: (g, 0, 0)),     # x rows (+residual)
                pl.BlockSpec((3 * WC, WC), lambda g: (0, 0)),       # w1 (K-folded, scaled)
                pl.BlockSpec((1, WC), lambda g: (0, 0)),            # b1
                pl.BlockSpec((3 * WC, WC), lambda g: (0, 0)),       # w2
                pl.BlockSpec((1, WC), lambda g: (0, 0)),            # b2
            ],
            out_specs=pl.BlockSpec((nb, H, WC), lambda g: (g, 0, 0)),
        ),
        compiler_params=pltpu.CompilerParams(
            dimension_semantics=("parallel",),       # shards grid over TCs on v7x
            vmem_limit_bytes=vmem_limit,
        ),
    )(x_rows, w1_big, b1_t, w2_big, b2_t)

    return jnp.transpose(out_rows.reshape(N, H, W, Cout), (0, 3, 1, 2))  # back to NCHW


def _reference_forward(x_nchw, params):
    """Pure-JAX f32 reference (NCHW), for correctness check only."""
    s1, b1 = _fold_bn(params["g1"], params["be1"], params["m1"], params["v1"])
    s2, b2 = _fold_bn(params["g2"], params["be2"], params["m2"], params["v2"])
    dn = ("NCHW", "OIHW", "NCHW")
    out = lax.conv_general_dilated(x_nchw, params["w1"], (1, 1), ((1, 1), (1, 1)),
                                   dimension_numbers=dn)
    out = out * s1[None, :, None, None] + b1[None, :, None, None]
    out = jnp.maximum(out, 0.0)
    out = lax.conv_general_dilated(out, params["w2"], (1, 1), ((1, 1), (1, 1)),
                                   dimension_numbers=dn)
    out = out * s2[None, :, None, None] + b2[None, :, None, None]
    return jnp.maximum(out + x_nchw, 0.0)


if __name__ == "__main__":
    # Small shapes: inplanes = planes = 8, stride = 1, downsample = None.
    # W * C = 16 * 8 = 128 so the kernel's lane axis is exactly full-width;
    # N = 16 gives 8 grid steps of 2 images each (M = 32 rows per matmul here).
    N, C, H, W = 16, 8, 16, 16

    key = jax.random.PRNGKey(0)
    kx, kw1, kw2 = jax.random.split(key, 3)

    x = jax.random.normal(kx, (N, C, H, W), dtype=jnp.float32)

    # Deterministic parameter init (synthetic; BatchNorm taken in inference form).
    # TODO(synk): PyTorch BatchNorm2d in training mode uses batch statistics; here
    # running-stat (eval) semantics are implemented and folded to scale/bias.
    params = {
        "w1": 0.1 * jax.random.normal(kw1, (C, C, 3, 3), dtype=jnp.float32),
        "w2": 0.1 * jax.random.normal(kw2, (C, C, 3, 3), dtype=jnp.float32),
        "g1": 1.0 + 0.10 * jnp.arange(C, dtype=jnp.float32),
        "be1": 0.05 * jnp.arange(C, dtype=jnp.float32),
        "m1": 0.01 * jnp.arange(C, dtype=jnp.float32),
        "v1": 1.0 + 0.02 * jnp.arange(C, dtype=jnp.float32),
        "g2": 1.0 - 0.05 * jnp.arange(C, dtype=jnp.float32),
        "be2": -0.03 * jnp.arange(C, dtype=jnp.float32),
        "m2": -0.02 * jnp.arange(C, dtype=jnp.float32),
        "v2": 1.0 + 0.01 * jnp.arange(C, dtype=jnp.float32),
    }

    fwd = jax.jit(basic_block_forward)
    out = jax.block_until_ready(fwd(x, params))

    ref = jax.block_until_ready(_reference_forward(x, params))
    # bf16 MXU operands (f32 accumulation) -> compare against the f32 reference
    # with a bf16-appropriate tolerance.
    np.testing.assert_allclose(np.asarray(out), np.asarray(ref), rtol=2e-2, atol=2e-2)

    print("KERNEL_OK")
</pallas_src>

<mosaic_0001>
module attributes {stable_mosaic.version = 11 : i64} {
  func.func @_basic_block_kernel(%arg0: i32, %arg1: memref<2x16x128xf32, #tpu.memory_space<vmem>>, %arg2: memref<384x128xbf16, #tpu.memory_space<vmem>>, %arg3: memref<1x128xf32, #tpu.memory_space<vmem>>, %arg4: memref<384x128xbf16, #tpu.memory_space<vmem>>, %arg5: memref<1x128xf32, #tpu.memory_space<vmem>>, %arg6: memref<2x16x128xf32, #tpu.memory_space<vmem>>) attributes {dimension_semantics = [#tpu.dimension_semantics<parallel>], iteration_bounds = array<i64: 8>, scalar_prefetch = 0 : i64, scratch_operands = 0 : i64, tpu.core_type = #tpu.core_type<tc>, window_params = [{transform_indices = @transform_0, window_bounds = array<i64: 2, 16, 128>}, {pipeline_mode = #tpu.pipeline_mode<synchronous>, transform_indices = @transform_1, window_bounds = array<i64: 384, 128>}, {pipeline_mode = #tpu.pipeline_mode<synchronous>, transform_indices = @transform_2, window_bounds = array<i64: 1, 128>}, {pipeline_mode = #tpu.pipeline_mode<synchronous>, transform_indices = @transform_3, window_bounds = array<i64: 384, 128>}, {pipeline_mode = #tpu.pipeline_mode<synchronous>, transform_indices = @transform_4, window_bounds = array<i64: 1, 128>}, {transform_indices = @transform_5, window_bounds = array<i64: 2, 16, 128>}]} {
    %c0 = arith.constant 0 : index
    %c0_0 = arith.constant 0 : index
    %c0_1 = arith.constant 0 : index
    %0 = vector.load %arg1[%c0, %c0_0, %c0_1] : memref<2x16x128xf32, #tpu.memory_space<vmem>>, vector<2x16x128xf32>
    %cst = arith.constant 0.000000e+00 : f32
    %1 = vector.broadcast %cst : f32 to vector<2x1x128xf32>
    %2 = tpu.concatenate %1, %0, %1 in 1 : vector<2x1x128xf32>, vector<2x16x128xf32>, vector<2x1x128xf32> -> vector<2x18x128xf32>
    %3 = vector.extract_strided_slice %2 {offsets = [0, 0, 0], sizes = [2, 16, 128], strides = [1, 1, 1]} : vector<2x18x128xf32> to vector<2x16x128xf32>
    %4 = vector.extract_strided_slice %2 {offsets = [0, 1, 0], sizes = [2, 16, 128], strides = [1, 1, 1]} : vector<2x18x128xf32> to vector<2x16x128xf32>
    %5 = vector.extract_strided_slice %2 {offsets = [0, 2, 0], sizes = [2, 16, 128], strides = [1, 1, 1]} : vector<2x18x128xf32> to vector<2x16x128xf32>
    %6 = tpu.concatenate %3, %4, %5 in 2 : vector<2x16x128xf32>, vector<2x16x128xf32>, vector<2x16x128xf32> -> vector<2x16x384xf32>
    %7 = vector.shape_cast %6 : vector<2x16x384xf32> to vector<32x384xf32>
    %8 = arith.truncf %7 : vector<32x384xf32> to vector<32x384xbf16>
    %c0_2 = arith.constant 0 : index
    %c0_3 = arith.constant 0 : index
    %9 = vector.load %arg2[%c0_2, %c0_3] : memref<384x128xbf16, #tpu.memory_space<vmem>>, vector<384x128xbf16>
    %cst_4 = arith.constant dense<0.000000e+00> : vector<32x128xf32>
    %10 = tpu.matmul %8, %9, %cst_4 {dimension_numbers = #tpu.dot_dimension_numbers<[1], [0], [0], [1], [0, 0, 1, 1], [], []>} : vector<32x384xbf16>, vector<384x128xbf16>, vector<32x128xf32> -> vector<32x128xf32>
    %c0_5 = arith.constant 0 : index
    %c0_6 = arith.constant 0 : index
    %11 = vector.load %arg3[%c0_5, %c0_6] : memref<1x128xf32, #tpu.memory_space<vmem>>, vector<1x128xf32>
    %12 = vector.broadcast %11 : vector<1x128xf32> to vector<32x128xf32>
    %13 = arith.addf %10, %12 : vector<32x128xf32>
    %cst_7 = arith.constant 0.000000e+00 : f32
    %14 = vector.broadcast %cst_7 : f32 to vector<32x128xf32>
    %15 = arith.maximumf %13, %14 : vector<32x128xf32>
    %16 = vector.shape_cast %15 : vector<32x128xf32> to vector<2x16x128xf32>
    %cst_8 = arith.constant 0.000000e+00 : f32
    %17 = vector.broadcast %cst_8 : f32 to vector<2x1x128xf32>
    %18 = tpu.concatenate %17, %16, %17 in 1 : vector<2x1x128xf32>, vector<2x16x128xf32>, vector<2x1x128xf32> -> vector<2x18x128xf32>
    %19 = vector.extract_strided_slice %18 {offsets = [0, 0, 0], sizes = [2, 16, 128], strides = [1, 1, 1]} : vector<2x18x128xf32> to vector<2x16x128xf32>
    %20 = vector.extract_strided_slice %18 {offsets = [0, 1, 0], sizes = [2, 16, 128], strides = [1, 1, 1]} : vector<2x18x128xf32> to vector<2x16x128xf32>
    %21 = vector.extract_strided_slice %18 {offsets = [0, 2, 0], sizes = [2, 16, 128], strides = [1, 1, 1]} : vector<2x18x128xf32> to vector<2x16x128xf32>
    %22 = tpu.concatenate %19, %20, %21 in 2 : vector<2x16x128xf32>, vector<2x16x128xf32>, vector<2x16x128xf32> -> vector<2x16x384xf32>
    %23 = vector.shape_cast %22 : vector<2x16x384xf32> to vector<32x384xf32>
    %24 = arith.truncf %23 : vector<32x384xf32> to vector<32x384xbf16>
    %c0_9 = arith.constant 0 : index
    %c0_10 = arith.constant 0 : index
    %25 = vector.load %arg4[%c0_9, %c0_10] : memref<384x128xbf16, #tpu.memory_space<vmem>>, vector<384x128xbf16>
    %cst_11 = arith.constant dense<0.000000e+00> : vector<32x128xf32>
    %26 = tpu.matmul %24, %25, %cst_11 {dimension_numbers = #tpu.dot_dimension_numbers<[1], [0], [0], [1], [0, 0, 1, 1], [], []>} : vector<32x384xbf16>, vector<384x128xbf16>, vector<32x128xf32> -> vector<32x128xf32>
    %c0_12 = arith.constant 0 : index
    %c0_13 = arith.constant 0 : index
    %27 = vector.load %arg5[%c0_12, %c0_13] : memref<1x128xf32, #tpu.memory_space<vmem>>, vector<1x128xf32>
    %28 = vector.broadcast %27 : vector<1x128xf32> to vector<32x128xf32>
    %29 = arith.addf %26, %28 : vector<32x128xf32>
    %30 = vector.shape_cast %0 : vector<2x16x128xf32> to vector<32x128xf32>
    %31 = arith.addf %29, %30 : vector<32x128xf32>
    %cst_14 = arith.constant 0.000000e+00 : f32
    %32 = vector.broadcast %cst_14 : f32 to vector<32x128xf32>
    %33 = arith.maximumf %31, %32 : vector<32x128xf32>
    %34 = vector.shape_cast %33 : vector<32x128xf32> to vector<2x16x128xf32>
    %c0_15 = arith.constant 0 : index
    %c0_16 = arith.constant 0 : index
    %c0_17 = arith.constant 0 : index
    %35 = vector.load %arg6[%c0_15, %c0_16, %c0_17] : memref<2x16x128xf32, #tpu.memory_space<vmem>>, vector<2x16x128xf32>
    tpu.vector_store %arg6[%c0_15, %c0_16, %c0_17], %34 {strides = array<i32>} : memref<2x16x128xf32, #tpu.memory_space<vmem>>, vector<2x16x128xf32>,
    return
  }
  func.func @transform_0(%arg0: i32) -> (i32, i32, i32) {
    %c0_i32 = arith.constant 0 : i32
    %c0_i32_0 = arith.constant 0 : i32
    %c0_i32_1 = arith.constant 0 : i32
    return %arg0, %c0_i32, %c0_i32_0 : i32, i32, i32
  }
  func.func @transform_1(%arg0: i32) -> (i32, i32) {
    %c0_i32 = arith.constant 0 : i32
    %c0_i32_0 = arith.constant 0 : i32
    %c0_i32_1 = arith.constant 0 : i32
    return %c0_i32, %c0_i32_0 : i32, i32
  }
  func.func @transform_2(%arg0: i32) -> (i32, i32) {
    %c0_i32 = arith.constant 0 : i32
    %c0_i32_0 = arith.constant 0 : i32
    %c0_i32_1 = arith.constant 0 : i32
    return %c0_i32, %c0_i32_0 : i32, i32
  }
  func.func @transform_3(%arg0: i32) -> (i32, i32) {
    %c0_i32 = arith.constant 0 : i32
    %c0_i32_0 = arith.constant 0 : i32
    %c0_i32_1 = arith.constant 0 : i32
    return %c0_i32, %c0_i32_0 : i32, i32
  }
  func.func @transform_4(%arg0: i32) -> (i32, i32) {
    %c0_i32 = arith.constant 0 : i32
    %c0_i32_0 = arith.constant 0 : i32
    %c0_i32_1 = arith.constant 0 : i32
    return %c0_i32, %c0_i32_0 : i32, i32
  }
  func.func @transform_5(%arg0: i32) -> (i32, i32, i32) {
    %c0_i32 = arith.constant 0 : i32
    %c0_i32_0 = arith.constant 0 : i32
    %c0_i32_1 = arith.constant 0 : i32
    return %arg0, %c0_i32, %c0_i32_0 : i32, i32, i32
  }
}

</mosaic_0001>

<llo_original>
// kernel: tile.13
$region0: #{tile.13}
  #allocation0 [shape = 's32[1]{0}', space=sflag, size = 0x4, scoped, tag = 'scoped memory for tile.13']
  %s0 = inlined_call_operand.vmem [shape: f32[8], index: 0, kind: input, shape index: {}]
  %s1 = inlined_call_operand.vmem [shape: f32[16,8], index: 1, kind: output, shape index: {}]
  // Predicated region
  $region2: #{tile.13} parent=0 // pred_check
    _
  $region3: #{tile.13} parent=0 // pred_check_branch
    %3 = sbr.rel (0) target = $region5
  $region4: #{tile.13} parent=0 // pred_region
    _
  $region5: #{tile.13} parent=0 // pred_fallthru
    _
  %v4 = vld [vmem:[%s0] ss:$0 sm:$0xff]
  %5 = vst [vmem:[%s1] sm:$0xff] %v4
  %s6 = scalar_lea.vmem %s1, 8
  %7 = vst [vmem:[%s6] sm:$0xff] %v4

// kernel: tile.14
$region0: #{tile.14}
  %s0 = inlined_call_operand.vmem [shape: f32[16,8], index: 0, kind: input, shape index: {}]
  %s1 = inlined_call_operand.vmem [shape: f32[1,128], index: 1, kind: output, shape index: {}]
  $region1: #{tile.14} parent=0
    #allocation0 [shape = 'u8[4096]{0}', space=vmem, size = 0x1000, scoped, tag = 'scoped mem for output reshape']
    %v2 = vld [vmem:[%s0] sm:$0x1]
    %vm3 = vcmask 64512
    %4 = vst.msk [vmem:[#allocation0] sm:$0x1] %vm3, %v2
    %s5 = scalar_lea.vmem %s0, 15
    %v6 = vld [vmem:[%s5] sm:$0x1]
    %7 = vrot.lane.b32.xlu0 %v6, 120
    %v8 = vpop.permute.xlu0 %7
    %vm9 = vcmask 1048512
    %10 = vst.msk [vmem:[#allocation0] sm:$0x1] %vm9, %v8
    %s11 = scalar_lea.vmem %s0, 14
    %v12 = vld [vmem:[%s11] sm:$0x1]
    %13 = vrot.lane.b32.xlu0 %v12, 112
    %v14 = vpop.permute.xlu0 %13
    %vm15 = vcmask 982912
    %16 = vst.msk [vmem:[#allocation0] sm:$0x1] %vm15, %v14
    %s17 = scalar_lea.vmem %s0, 13
    %v18 = vld [vmem:[%s17] sm:$0x1]
    %19 = vrot.lane.b32.xlu0 %v18, 104
    %v20 = vpop.permute.xlu0 %19
    %vm21 = vcmask 917312
    %22 = vst.msk [vmem:[#allocation0] sm:$0x1] %vm21, %v20
    %s23 = scalar_lea.vmem %s0, 12
    %v24 = vld [vmem:[%s23] sm:$0x1]
    %25 = vrot.lane.b32.xlu0 %v24, 96
    %v26 = vpop.permute.xlu0 %25
    %vm27 = vcmask 851712
    %28 = vst.msk [vmem:[#allocation0] sm:$0x1] %vm27, %v26
    %s29 = scalar_lea.vmem %s0, 11
    %v30 = vld [vmem:[%s29] sm:$0x1]
    %31 = vrot.lane.b32.xlu0 %v30, 88
    %v32 = vpop.permute.xlu0 %31
    %vm33 = vcmask 786112
    %34 = vst.msk [vmem:[#allocation0] sm:$0x1] %vm33, %v32
    %s35 = scalar_lea.vmem %s0, 10
    %v36 = vld [vmem:[%s35] sm:$0x1]
    %37 = vrot.lane.b32.xlu0 %v36, 80
    %v38 = vpop.permute.xlu0 %37
    %vm39 = vcmask 720512
    %40 = vst.msk [vmem:[#allocation0] sm:$0x1] %vm39, %v38
    %s41 = scalar_lea.vmem %s0, 9
    %v42 = vld [vmem:[%s41] sm:$0x1]
    %43 = vrot.lane.b32.xlu0 %v42, 72
    %v44 = vpop.permute.xlu0 %43
    %vm45 = vcmask 654912
    %46 = vst.msk [vmem:[#allocation0] sm:$0x1] %vm45, %v44
    %s47 = scalar_lea.vmem %s0, 8
    %v48 = vld [vmem:[%s47] sm:$0x1]
    %49 = vrot.lane.b32.xlu0 %v48, 64
    %v50 = vpop.permute.xlu0 %49
    %vm51 = vcmask 589312
    %52 = vst.msk [vmem:[#allocation0] sm:$0x1] %vm51, %v50
    %s53 = scalar_lea.vmem %s0, 7
    %v54 = vld [vmem:[%s53] sm:$0x1]
    %55 = vrot.lane.b32.xlu0 %v54, 56
    %v56 = vpop.permute.xlu0 %55
    %vm57 = vcmask 523712
    %58 = vst.msk [vmem:[#allocation0] sm:$0x1] %vm57, %v56
    %s59 = scalar_lea.vmem %s0, 6
    %v60 = vld [vmem:[%s59] sm:$0x1]
    %61 = vrot.lane.b32.xlu0 %v60, 48
    %v62 = vpop.permute.xlu0 %61
    %vm63 = vcmask 458112
    %64 = vst.msk [vmem:[#allocation0] sm:$0x1] %vm63, %v62
    %s65 = scalar_lea.vmem %s0, 5
    %v66 = vld [vmem:[%s65] sm:$0x1]
    %67 = vrot.lane.b32.xlu0 %v66, 40
    %v68 = vpop.permute.xlu0 %67
    %vm69 = vcmask 392512
    %70 = vst.msk [vmem:[#allocation0] sm:$0x1] %vm69, %v68
    %s71 = scalar_lea.vmem %s0, 4
    %v72 = vld [vmem:[%s71] sm:$0x1]
    %73 = vrot.lane.b32.xlu0 %v72, 32
    %v74 = vpop.permute.xlu0 %73
    %vm75 = vcmask 326912
    %76 = vst.msk [vmem:[#allocation0] sm:$0x1] %vm75, %v74
    %s77 = scalar_lea.vmem %s0, 3
    %v78 = vld [vmem:[%s77] sm:$0x1]
    %79 = vrot.lane.b32.xlu0 %v78, 24
    %v80 = vpop.permute.xlu0 %79
    %vm81 = vcmask 261312
    %82 = vst.msk [vmem:[#allocation0] sm:$0x1] %vm81, %v80
    %s83 = scalar_lea.vmem %s0, 2
    %v84 = vld [vmem:[%s83] sm:$0x1]
    %85 = vrot.lane.b32.xlu0 %v84, 16
    %v86 = vpop.permute.xlu0 %85
    %vm87 = vcmask 195712
    %88 = vst.msk [vmem:[#allocation0] sm:$0x1] %vm87, %v86
    %s89 = scalar_lea.vmem %s0, 1
    %v90 = vld [vmem:[%s89] sm:$0x1]
    %91 = vrot.lane.b32.xlu0 %v90, 8
    %v92 = vpop.permute.xlu0 %91
    %vm93 = vcmask 130112
    %94 = vst.msk [vmem:[#allocation0] sm:$0x1] %vm93, %v92
    %s96 = sshll.u32 1, 1
    %s97 = ssub.s32 %s96, 1
    %v99 = vld [vmem:[#allocation0] sm:%s97]
    %s100 = sshll.u32 1, 1
    %s101 = ssub.s32 %s100, 1
    %102 = vst [vmem:[%s1] sm:%s101] %v99

// kernel: basic_block_forward.1
$region0: #{basic_block_forward.1}
  #allocation0 [shape = 'u32[]', space=smem, size = 0x4, offset = 0x4, fixed_abs, tag = 'smem constant byte address 0x4 - core index']
  #allocation1 [shape = 'u32[144,128]{1,0:T(1,128)}', space=vmem, size = 0x12000, scoped, tag = 'internal scratch']
  %s0 = inlined_call_operand.vmem [shape: f32[16,16,128], index: 0, kind: input, shape index: {}]
  %s1 = inlined_call_operand.vmem [shape: bf16[384,128], index: 1, kind: input, shape index: {}]
  %s2 = inlined_call_operand.vmem [shape: f32[1,128], index: 2, kind: input, shape index: {}]
  %s3 = inlined_call_operand.vmem [shape: bf16[384,128], index: 3, kind: input, shape index: {}]
  %s4 = inlined_call_operand.vmem [shape: f32[1,128], index: 4, kind: input, shape index: {}]
  %s5 = inlined_call_operand.vmem [shape: f32[16,16,128], index: 5, kind: output, shape index: {}]
  %s6 = sld [smem:[#allocation0]]
  $region53: #{basic_block_forward.1} parent=0
    _
  %s8 = ssub.s32 1, %s6
  %s9 = scalar_select 0, %s8, %s6
  loop: start=0, step=1, limit=10
  $region2: #{basic_block_forward.1} parent=0 // loop_pre_header
    _
  $region3: #{basic_block_forward.1} parent=0 // loop_header
    %s11 = sphi 0, %s15
    %p12 = scmp.ge.s32.totalorder %s11, 10
    %s21 = sphi 0, %s23
    %s24 = sphi 0, %s21
    %s25 = sphi 0, %s24
    %s41 = sphi 0, %s25
    %s45 = sphi 0, %s45
    %s47 = sphi 0, %s45
    %s48 = sphi 0, %s47
    %s62 = sphi 0, %s48
    %s66 = sphi 0, %s66
    %s68 = sphi 0, %s66
    %s69 = sphi 0, %s68
    %s83 = sphi 0, %s69
    %s87 = sphi 0, %s87
    %s89 = sphi 0, %s87
    %s90 = sphi 0, %s89
    %s104 = sphi 0, %s90
    %s108 = sphi 0, %s108
    %s110 = sphi 0, %s108
    %s111 = sphi 0, %s110
    %s125 = sphi 0, %s111
    %s131 = sphi 0, %s133
    %s134 = sphi 0, %s131
    %s135 = sphi 0, %s134
    %s151 = sphi 0, %s135
  $region4: #{basic_block_forward.1} parent=0 // loop_header_branch
    %14 = sbr.rel (%p12) target = $region8
  $region5: #{basic_block_forward.1} parent=0 // loop_body
    %s16 = ssub.s32 %s11, 1
    %s17 = ssub.s32 %s11, 2
    %s18 = sadd.s32 %s11, 1
    %s19 = ssub.s32 %s11, %s18
    %p20 = scmp.eq.s32.totalorder %s19, 0
    %s22 = sadd.s32 %s21, 1
    %s23 = scalar_select %p20, %s21, %s22
    %p26 = pneg %p20
    %p27 = scmp.eq.s32.totalorder %s11, 7
    %p28 = por %p26, %p27
    %p29 = scmp.ne.s32.totalorder %s21, %s24
    %p30 = scmp.eq.s32.totalorder %s11, 0
    %p31 = por %p29, %p30
    %p32 = scmp.ne.s32.totalorder %s21, %s24
    %p33 = scmp.eq.s32.totalorder %s16, 7
    %p34 = por %p32, %p33
    %p35 = scmp.ne.s32.totalorder %s24, %s25
    %p36 = scmp.eq.s32.totalorder %s16, 0
    %p37 = por %p35, %p36
    %p38 = scmp.ne.s32.totalorder %s24, %s25
    %p39 = scmp.eq.s32.totalorder %s17, 7
    %p40 = por %p38, %p39
    %p42 = scmp.ne.s32.totalorder %s25, %s41
    %p43 = scmp.eq.s32.totalorder %s17, 0
    %p44 = por %p42, %p43
    %s46 = sadd.s32 %s45, 1
    %p49 = scmp.eq.s32.totalorder %s11, 7
    %p50 = scmp.ne.s32.totalorder %s45, %s47
    %p51 = scmp.eq.s32.totalorder %s11, 0
    %p52 = por %p50, %p51
    %p53 = scmp.ne.s32.totalorder %s45, %s47
    %p54 = scmp.eq.s32.totalorder %s16, 7
    %p55 = por %p53, %p54
    %p56 = scmp.ne.s32.totalorder %s47, %s48
    %p57 = scmp.eq.s32.totalorder %s16, 0
    %p58 = por %p56, %p57
    %p59 = scmp.ne.s32.totalorder %s47, %s48
    %p60 = scmp.eq.s32.totalorder %s17, 7
    %p61 = por %p59, %p60
    %p63 = scmp.ne.s32.totalorder %s48, %s62
    %p64 = scmp.eq.s32.totalorder %s17, 0
    %p65 = por %p63, %p64
    %s67 = sadd.s32 %s66, 1
    %p70 = scmp.eq.s32.totalorder %s11, 7
    %p71 = scmp.ne.s32.totalorder %s66, %s68
    %p72 = scmp.eq.s32.totalorder %s11, 0
    %p73 = por %p71, %p72
    %p74 = scmp.ne.s32.totalorder %s66, %s68
    %p75 = scmp.eq.s32.totalorder %s16, 7
    %p76 = por %p74, %p75
    %p77 = scmp.ne.s32.totalorder %s68, %s69
    %p78 = scmp.eq.s32.totalorder %s16, 0
    %p79 = por %p77, %p78
    %p80 = scmp.ne.s32.totalorder %s68, %s69
    %p81 = scmp.eq.s32.totalorder %s17, 7
    %p82 = por %p80, %p81
    %p84 = scmp.ne.s32.totalorder %s69, %s83
    %p85 = scmp.eq.s32.totalorder %s17, 0
    %p86 = por %p84, %p85
    %s88 = sadd.s32 %s87, 1
    %p91 = scmp.eq.s32.totalorder %s11, 7
    %p92 = scmp.ne.s32.totalorder %s87, %s89
    %p93 = scmp.eq.s32.totalorder %s11, 0
    %p94 = por %p92, %p93
    %p95 = scmp.ne.s32.totalorder %s87, %s89
    %p96 = scmp.eq.s32.totalorder %s16, 7
    %p97 = por %p95, %p96
    %p98 = scmp.ne.s32.totalorder %s89, %s90
    %p99 = scmp.eq.s32.totalorder %s16, 0
    %p100 = por %p98, %p99
    %p101 = scmp.ne.s32.totalorder %s89, %s90
    %p102 = scmp.eq.s32.totalorder %s17, 7
    %p103 = por %p101, %p102
    %p105 = scmp.ne.s32.totalorder %s90, %s104
    %p106 = scmp.eq.s32.totalorder %s17, 0
    %p107 = por %p105, %p106
    %s109 = sadd.s32 %s108, 1
    %p112 = scmp.eq.s32.totalorder %s11, 7
    %p113 = scmp.ne.s32.totalorder %s108, %s110
    %p114 = scmp.eq.s32.totalorder %s11, 0
    %p115 = por %p113, %p114
    %p116 = scmp.ne.s32.totalorder %s108, %s110
    %p117 = scmp.eq.s32.totalorder %s16, 7
    %p118 = por %p116, %p117
    %p119 = scmp.ne.s32.totalorder %s110, %s111
    %p120 = scmp.eq.s32.totalorder %s16, 0
    %p121 = por %p119, %p120
    %p122 = scmp.ne.s32.totalorder %s110, %s111
    %p123 = scmp.eq.s32.totalorder %s17, 7
    %p124 = por %p122, %p123
    %p126 = scmp.ne.s32.totalorder %s111, %s125
    %p127 = scmp.eq.s32.totalorder %s17, 0
    %p128 = por %p126, %p127
    %s129 = ssub.s32 %s11, %s18
    %p130 = scmp.eq.s32.totalorder %s129, 0
    %s132 = sadd.s32 %s131, 1
    %s133 = scalar_select %p130, %s131, %s132
    %p136 = pneg %p130
    %p137 = scmp.eq.s32.totalorder %s11, 7
    %p138 = por %p136, %p137
    %p139 = scmp.ne.s32.totalorder %s131, %s134
    %p140 = scmp.eq.s32.totalorder %s11, 0
    %p141 = por %p139, %p140
    %p142 = scmp.ne.s32.totalorder %s131, %s134
    %p143 = scmp.eq.s32.totalorder %s16, 7
    %p144 = por %p142, %p143
    %p145 = scmp.ne.s32.totalorder %s134, %s135
    %p146 = scmp.eq.s32.totalorder %s16, 0
    %p147 = por %p145, %p146
    %p148 = scmp.ne.s32.totalorder %s134, %s135
    %p149 = scmp.eq.s32.totalorder %s17, 7
    %p150 = por %p148, %p149
    %p152 = scmp.ne.s32.totalorder %s135, %s151
    %p153 = scmp.eq.s32.totalorder %s17, 0
    %p154 = por %p152, %p153
    %p155 = scmp.le.s32.totalorder 1, %s11
    %p156 = scmp.lt.s32.totalorder %s11, 9
    %p157 = pnand %p155, %p156
    %p158 = pneg %p157
    // Predicated region
    $region9: #{basic_block_forward.1} parent=5 // pred_check
      _
    $region10: #{basic_block_forward.1} parent=5 // pred_check_branch
      %160 = sbr.rel (%p157) target = $region12
    $region11: #{basic_block_forward.1} parent=5 // pred_region
      %s161 = ssub.s32 %s11, 1
      // Predicated region
      $region13: #{basic_block_forward.1} parent=11 // pred_check
        %p162 = pneg %p58
      $region14: #{basic_block_forward.1} parent=11 // pred_check_branch
        %164 = sbr.rel (%p162) target = $region16
      $region15: #{basic_block_forward.1} parent=11 // pred_region
        _
      $region16: #{basic_block_forward.1} parent=11 // pred_fallthru
        _
      // Predicated region
      $region17: #{basic_block_forward.1} parent=11 // pred_check
        %p165 = pneg %p79
      $region18: #{basic_block_forward.1} parent=11 // pred_check_branch
        %167 = sbr.rel (%p165) target = $region20
      $region19: #{basic_block_forward.1} parent=11 // pred_region
        _
      $region20: #{basic_block_forward.1} parent=11 // pred_fallthru
        _
      // Predicated region
      $region21: #{basic_block_forward.1} parent=11 // pred_check
        %p168 = pneg %p100
      $region22: #{basic_block_forward.1} parent=11 // pred_check_branch
        %170 = sbr.rel (%p168) target = $region24
      $region23: #{basic_block_forward.1} parent=11 // pred_region
        _
      $region24: #{basic_block_forward.1} parent=11 // pred_fallthru
        _
      // Predicated region
      $region25: #{basic_block_forward.1} parent=11 // pred_check
        %p171 = pneg %p121
      $region26: #{basic_block_forward.1} parent=11 // pred_check_branch
        %173 = sbr.rel (%p171) target = $region28
      $region27: #{basic_block_forward.1} parent=11 // pred_region
        _
      $region28: #{basic_block_forward.1} parent=11 // pred_fallthru
        _
    $region12: #{basic_block_forward.1} parent=5 // pred_fallthru
      _
    %p174 = scmp.lt.s32.totalorder %s11, 8
    // Predicated region
    $region29: #{basic_block_forward.1} parent=5 // pred_check
      %p175 = pneg %p174
    $region30: #{basic_block_forward.1} parent=5 // pred_check_branch
      %177 = sbr.rel (%p175) target = $region32
    $region31: #{basic_block_forward.1} parent=5 // pred_region
      // Predicated region
      $region33: #{basic_block_forward.1} parent=31 // pred_check
        %p178 = pneg %p31
      $region34: #{basic_block_forward.1} parent=31 // pred_check_branch
        %180 = sbr.rel (%p178) target = $region36
      $region35: #{basic_block_forward.1} parent=31 // pred_region
        %s181 = smul.u32 2, %s11
        %p182 = scmp.lt.s32.totalorder %s181, 15
        %s183 = scalar_select %p182, %s181, 15
        %s184 = smul.addr %s183, 2
        %s185 = smul.addr %s184, 8
        %s186 = scalar_lea.vmem %s0, %s185
        %s187 = smul.u32 2, %s11
      $region36: #{basic_block_forward.1} parent=31 // pred_fallthru
        _
    $region32: #{basic_block_forward.1} parent=5 // pred_fallthru
      _
    %p188 = scmp.le.s32.totalorder 1, %s11
    %p189 = scmp.lt.s32.totalorder %s11, 9
    %p190 = pnand %p188, %p189
    %p191 = pneg %p190
    // Predicated region
    $region37: #{basic_block_forward.1} parent=5 // pred_check
      _
    $region38: #{basic_block_forward.1} parent=5 // pred_check_branch
      %193 = sbr.rel (%p190) target = $region40
    $region39: #{basic_block_forward.1} parent=5 // pred_region
      %s194 = ssub.s32 %s11, 1
      %s195 = smul.u32 2, %s16
      %p196 = scmp.lt.s32.totalorder %s195, 15
      %s197 = scalar_select %p196, %s195, 15
      %s198 = smul.addr %s197, 2
      %s199 = smul.addr %s198, 8
      %s200 = scalar_lea.vmem %s0, %s199
      %p201 = pneg %p37
      %p202 = pneg %p34
      %p203 = pneg %p58
      %p204 = pneg %p55
      %p205 = pneg %p79
      %p206 = pneg %p76
      %p207 = pneg %p100
      %p208 = pneg %p97
      %p209 = pneg %p121
      %p210 = pneg %p118
      %p211 = pneg %p147
      %p212 = pneg %p144
      %s213 = smul.u32 2, %s16
      %p214 = scmp.lt.s32.totalorder %s213, 15
      %s215 = scalar_select %p214, %s213, 15
      %s216 = smul.addr %s215, 2
      %s217 = smul.addr %s216, 8
      %s218 = scalar_lea.vmem %s5, %s217
      %s219 = smul.u32 2, %s16
      %p220 = scmp.lt.s32.totalorder %s219, 15
      %s221 = scalar_select %p220, %s219, 15
      %s222 = smul.addr %s221, 2
      %s223 = smul.addr %s222, 8
      %s224 = scalar_lea.vmem %s0, %s223
      %s225 = smul.u32 2, %s16
      %s226 = smul.u32 2, %s16
      %p227 = scmp.lt.s32.totalorder %s226, 15
      %s228 = scalar_select %p227, %s226, 15
      %s229 = smul.addr %s228, 2
      %s230 = smul.addr %s229, 8
      %s231 = scalar_lea.vmem %s5, %s230
      %s232 = smul.u32 2, %s16
      %v234 = vld [vmem:[%s224] sm:$0xff]
      %v235 = vld [vmem:[%s224 + $0x8] sm:$0xff]
      %v236 = vld [vmem:[%s224 + $0x10] sm:$0xff]
      %v237 = vld [vmem:[%s224 + $0x18] sm:$0xff]
      %vm242 = vcmask 1040384
      %v243 = vrot.slane %v234, 7
      %v244 = vrot.slane %v235, 7
      %v245 = vsel %vm242, %v243, %v244
      %v246 = vrot.slane %v236, 7
      %v247 = vrot.slane %v237, 7
      %v248 = vsel %vm242, %v246, %v247
      %v255 = vsel %vm242, 0.0, %v243
      %v256 = vsel %vm242, 0.0, %v246
      %v257 = vsel %vm242, %v244, 0.0
      %v258 = vsel %vm242, %v247, 0.0
      %vm263 = vcmask 1046528
      %v264 = vrot.slane %v255, 1
      %v265 = vrot.slane %v245, 1
      %v266 = vsel %vm263, %v264, %v265
      %v267 = vrot.slane %v257, 1
      %v268 = vsel %vm263, %v265, %v267
      %v269 = vrot.slane %v256, 1
      %v270 = vrot.slane %v248, 1
      %v271 = vsel %vm263, %v269, %v270
      %v272 = vrot.slane %v258, 1
      %v273 = vsel %vm263, %v270, %v272
      %vm278 = vcmask 1045504
      %v279 = vrot.slane %v255, 2
      %v280 = vrot.slane %v245, 2
      %v281 = vsel %vm278, %v279, %v280
      %v282 = vrot.slane %v257, 2
      %v283 = vsel %vm278, %v280, %v282
      %v284 = vrot.slane %v256, 2
      %v285 = vrot.slane %v248, 2
      %v286 = vsel %vm278, %v284, %v285
      %v287 = vrot.slane %v258, 2
      %v288 = vsel %vm278, %v285, %v287
      %v293 = vpack.c.bf16 %v245, %v255
      %v294 = vpack.c.bf16 %v268, %v266
      %v295 = vpack.c.bf16 %v283, %v281
      %v296 = vpack.c.bf16 %v248, %v256
      %v297 = vpack.c.bf16 %v273, %v271
      %v298 = vpack.c.bf16 %v288, %v286
      %v299 = vld [vmem:[%s1] sm:$0xf]
      %v300 = vld [vmem:[%s1 + $0x4] sm:$0xf]
      %v301 = vld [vmem:[%s1 + $0x8] sm:$0xf]
      %v302 = vld [vmem:[%s1 + $0xc] sm:$0xf]
      %v303 = vld [vmem:[%s1 + $0x10] sm:$0xf]
      %v304 = vld [vmem:[%s1 + $0x14] sm:$0xf]
      %v305 = vld [vmem:[%s1 + $0x18] sm:$0xf]
      %v306 = vld [vmem:[%s1 + $0x1c] sm:$0xf]
      %v307 = vld [vmem:[%s1 + $0x20] sm:$0xf]
      %v308 = vld [vmem:[%s1 + $0x24] sm:$0xf]
      %v309 = vld [vmem:[%s1 + $0x28] sm:$0xf]
      %v310 = vld [vmem:[%s1 + $0x2c] sm:$0xf]
      %v311 = vld [vmem:[%s1 + $0x30] sm:$0xf]
      %v312 = vld [vmem:[%s1 + $0x34] sm:$0xf]
      %v313 = vld [vmem:[%s1 + $0x38] sm:$0xf]
      %v314 = vld [vmem:[%s1 + $0x3c] sm:$0xf]
      %v315 = vld [vmem:[%s1 + $0x40] sm:$0xf]
      %v316 = vld [vmem:[%s1 + $0x44] sm:$0xf]
      %v317 = vld [vmem:[%s1 + $0x48] sm:$0xf]
      %v318 = vld [vmem:[%s1 + $0x4c] sm:$0xf]
      %v319 = vld [vmem:[%s1 + $0x50] sm:$0xf]
      %v320 = vld [vmem:[%s1 + $0x54] sm:$0xf]
      %v321 = vld [vmem:[%s1 + $0x58] sm:$0xf]
      %v322 = vld [vmem:[%s1 + $0x5c] sm:$0xf]
      %v323 = vld [vmem:[%s1 + $0x60] sm:$0xf]
      %v324 = vld [vmem:[%s1 + $0x64] sm:$0xf]
      %v325 = vld [vmem:[%s1 + $0x68] sm:$0xf]
      %v326 = vld [vmem:[%s1 + $0x6c] sm:$0xf]
      %v327 = vld [vmem:[%s1 + $0x70] sm:$0xf]
      %v328 = vld [vmem:[%s1 + $0x74] sm:$0xf]
      %v329 = vld [vmem:[%s1 + $0x78] sm:$0xf]
      %v330 = vld [vmem:[%s1 + $0x7c] sm:$0xf]
      %v331 = vld [vmem:[%s1 + $0x80] sm:$0xf]
      %v332 = vld [vmem:[%s1 + $0x84] sm:$0xf]
      %v333 = vld [vmem:[%s1 + $0x88] sm:$0xf]
      %v334 = vld [vmem:[%s1 + $0x8c] sm:$0xf]
      %v335 = vld [vmem:[%s1 + $0x90] sm:$0xf]
      %v336 = vld [vmem:[%s1 + $0x94] sm:$0xf]
      %v337 = vld [vmem:[%s1 + $0x98] sm:$0xf]
      %v338 = vld [vmem:[%s1 + $0x9c] sm:$0xf]
      %v339 = vld [vmem:[%s1 + $0xa0] sm:$0xf]
      %v340 = vld [vmem:[%s1 + $0xa4] sm:$0xf]
      %v341 = vld [vmem:[%s1 + $0xa8] sm:$0xf]
      %v342 = vld [vmem:[%s1 + $0xac] sm:$0xf]
      %v343 = vld [vmem:[%s1 + $0xb0] sm:$0xf]
      %v344 = vld [vmem:[%s1 + $0xb4] sm:$0xf]
      %v345 = vld [vmem:[%s1 + $0xb8] sm:$0xf]
      %v346 = vld [vmem:[%s1 + $0xbc] sm:$0xf]
      %v347 = vld [vmem:[%s2] sm:$0x1]
      %v349 = vlaneseq
      %v350 = vshrl.u32 %v349, 7
      %v351 = vsub.s32 0, %v350
      %v352 = vrot.slane %v347, %v351
      %v402 = vunpack.c.l.b16 %v299
      %v403 = vunpack.c.l.b16 %v300
      %v404 = vunpack.c.l.b16 %v301
      %v405 = vunpack.c.l.b16 %v302
      %v406 = vunpack.c.l.b16 %v303
      %v407 = vunpack.c.l.b16 %v304
      %v408 = vunpack.c.l.b16 %v305
      %v409 = vunpack.c.l.b16 %v306
      %v410 = vunpack.c.l.b16 %v307
      %v411 = vunpack.c.l.b16 %v308
      %v412 = vunpack.c.l.b16 %v309
      %v413 = vunpack.c.l.b16 %v310
      %v414 = vunpack.c.l.b16 %v311
      %v415 = vunpack.c.l.b16 %v312
      %v416 = vunpack.c.l.b16 %v313
      %v417 = vunpack.c.l.b16 %v314
      %v418 = vunpack.c.l.b16 %v315
      %v419 = vunpack.c.l.b16 %v316
      %v420 = vunpack.c.l.b16 %v317
      %v421 = vunpack.c.l.b16 %v318
      %v422 = vunpack.c.l.b16 %v319
      %v423 = vunpack.c.l.b16 %v320
      %v424 = vunpack.c.l.b16 %v321
      %v425 = vunpack.c.l.b16 %v322
      %v426 = vunpack.c.l.b16 %v323
      %v427 = vunpack.c.l.b16 %v324
      %v428 = vunpack.c.l.b16 %v325
      %v429 = vunpack.c.l.b16 %v326
      %v430 = vunpack.c.l.b16 %v327
      %v431 = vunpack.c.l.b16 %v328
      %v432 = vunpack.c.l.b16 %v329
      %v433 = vunpack.c.l.b16 %v330
      %v434 = vunpack.c.l.b16 %v331
      %v435 = vunpack.c.l.b16 %v332
      %v436 = vunpack.c.l.b16 %v333
      %v437 = vunpack.c.l.b16 %v334
      %v438 = vunpack.c.l.b16 %v335
      %v439 = vunpack.c.l.b16 %v336
      %v440 = vunpack.c.l.b16 %v337
      %v441 = vunpack.c.l.b16 %v338
      %v442 = vunpack.c.l.b16 %v339
      %v443 = vunpack.c.l.b16 %v340
      %v444 = vunpack.c.l.b16 %v341
      %v445 = vunpack.c.l.b16 %v342
      %v446 = vunpack.c.l.b16 %v343
      %v447 = vunpack.c.l.b16 %v344
      %v448 = vunpack.c.l.b16 %v345
      %v449 = vunpack.c.l.b16 %v346
      %v450 = vpack.c.b16 %v403, %v402
      %v451 = vpack.c.b16 %v405, %v404
      %v452 = vpack.c.b16 %v407, %v406
      %v453 = vpack.c.b16 %v409, %v408
      %v454 = vpack.c.b16 %v411, %v410
      %v455 = vpack.c.b16 %v413, %v412
      %v456 = vpack.c.b16 %v415, %v414
      %v457 = vpack.c.b16 %v417, %v416
      %v458 = vpack.c.b16 %v419, %v418
      %v459 = vpack.c.b16 %v421, %v420
      %v460 = vpack.c.b16 %v423, %v422
      %v461 = vpack.c.b16 %v425, %v424
      %v462 = vpack.c.b16 %v427, %v426
      %v463 = vpack.c.b16 %v429, %v428
      %v464 = vpack.c.b16 %v431, %v430
      %v465 = vpack.c.b16 %v433, %v432
      %v466 = vpack.c.b16 %v435, %v434
      %v467 = vpack.c.b16 %v437, %v436
      %v468 = vpack.c.b16 %v439, %v438
      %v469 = vpack.c.b16 %v441, %v440
      %v470 = vpack.c.b16 %v443, %v442
      %v471 = vpack.c.b16 %v445, %v444
      %v472 = vpack.c.b16 %v447, %v446
      %v473 = vpack.c.b16 %v449, %v448
      %498 = vmatprep.subr.bf16.mxu0 0
      %499 = vmatpush1.bf16.msra.mxu0 %v457
      %500 = vmatprep.subr.bf16.mxu0 0
      %501 = vmatpush1.bf16.msra.mxu0 %v456
      %502 = vmatprep.subr.bf16.mxu0 0
      %503 = vmatpush1.bf16.msra.mxu0 %v455
      %504 = vmatprep.subr.bf16.mxu0 0
      %505 = vmatpush1.bf16.msra.mxu0 %v454
      %506 = vmatprep.subr.bf16.mxu0 0
      %507 = vmatpush1.bf16.msra.mxu0 %v453
      %508 = vmatprep.subr.bf16.mxu0 0
      %509 = vmatpush1.bf16.msra.mxu0 %v452
      %510 = vmatprep.subr.bf16.mxu0 0
      %511 = vmatpush1.bf16.msra.mxu0 %v451
      %512 = vmatprep.subr.bf16.mxu0 0
      %513 = vmatpush1.bf16.msra.mxu0 %v450
      %514 = vmatprep.subr.bf16.mxu0 0
      %515 = vmatpush2.bf16.msra.mxu0 %v465
      %516 = vmatprep.subr.bf16.mxu0 0
      %517 = vmatpush2.bf16.msra.mxu0 %v464
      %518 = vmatprep.subr.bf16.mxu0 0
      %519 = vmatpush2.bf16.msra.mxu0 %v463
      %520 = vmatprep.subr.bf16.mxu0 0
      %521 = vmatpush2.bf16.msra.mxu0 %v462
      %522 = vmatprep.subr.bf16.mxu0 0
      %523 = vmatpush2.bf16.msra.mxu0 %v461
      %524 = vmatprep.subr.bf16.mxu0 0
      %525 = vmatpush2.bf16.msra.mxu0 %v460
      %526 = vmatprep.subr.bf16.mxu0 0
      %527 = vmatpush2.bf16.msra.mxu0 %v459
      %528 = vmatprep.subr.bf16.mxu0 0
      %529 = vmatpush2.bf16.msra.mxu0 %v458
      %530 = vmatprep.mubr.bf16.mxu0 %v294
      %531 = vmatmul.mubr.bf16.gmra.mxu0 %v293
      %v532 = vpop.f32.mrf.mxu0
      %v533 = vadd.f32 %v352, %v532
      %v534 = vpop.f32.mrf.mxu0
      %v535 = vpop.f32.mrf.mxu0
      %v536 = vadd.f32 %v352, %v535
      %v537 = vpop.f32.mrf.mxu0
      %538 = vmatprep.mubr.bf16.mxu0 %v297
      %539 = vmatmul.mubr.bf16.gmra.mxu0 %v296
      %v540 = vpop.f32.mrf.mxu0
      %v541 = vadd.f32 %v352, %v540
      %v542 = vpop.f32.mrf.mxu0
      %v543 = vpop.f32.mrf.mxu0
      %v544 = vadd.f32 %v352, %v543
      %v545 = vpop.f32.mrf.mxu0
      %546 = vdwg.mxu0
      %547 = vmatprep.subr.bf16.mxu0 0
      %548 = vmatpush1.bf16.msra.mxu0 %v473
      %549 = vmatprep.subr.bf16.mxu0 0
      %550 = vmatpush1.bf16.msra.mxu0 %v472
      %551 = vmatprep.subr.bf16.mxu0 0
      %552 = vmatpush1.bf16.msra.mxu0 %v471
      %553 = vmatprep.subr.bf16.mxu0 0
      %554 = vmatpush1.bf16.msra.mxu0 %v470
      %555 = vmatprep.subr.bf16.mxu0 0
      %556 = vmatpush1.bf16.msra.mxu0 %v469
      %557 = vmatprep.subr.bf16.mxu0 0
      %558 = vmatpush1.bf16.msra.mxu0 %v468
      %559 = vmatprep.subr.bf16.mxu0 0
      %560 = vmatpush1.bf16.msra.mxu0 %v467
      %561 = vmatprep.subr.bf16.mxu0 0
      %562 = vmatpush1.bf16.msra.mxu0 %v466
      %563 = vmatprep.subr.bf16.mxu0 0
      %564 = vmatpush2.bf16.msra.mxu0 0
      %565 = vmatprep.subr.bf16.mxu0 0
      %566 = vmatpush2.bf16.msra.mxu0 0
      %567 = vmatprep.subr.bf16.mxu0 0
      %568 = vmatpush2.bf16.msra.mxu0 0
      %569 = vmatprep.subr.bf16.mxu0 0
      %570 = vmatpush2.bf16.msra.mxu0 0
      %571 = vmatprep.subr.bf16.mxu0 0
      %572 = vmatpush2.bf16.msra.mxu0 0
      %573 = vmatprep.subr.bf16.mxu0 0
      %574 = vmatpush2.bf16.msra.mxu0 0
      %575 = vmatprep.subr.bf16.mxu0 0
      %576 = vmatpush2.bf16.msra.mxu0 0
      %577 = vmatprep.subr.bf16.mxu0 0
      %578 = vmatpush2.bf16.msra.mxu0 0
      %579 = vmatprep.mubr.bf16.mxu0 0
      %580 = vmatmul.mubr.bf16.gmra.mxu0 %v295
      %v581 = vpop.f32.mrf.mxu0
      %v582 = vadd.f32 %v533, %v581
      %v583 = vpop.f32.mrf.mxu0
      %v584 = vpop.f32.mrf.mxu0
      %v585 = vadd.f32 %v536, %v584
      %v586 = vpop.f32.mrf.mxu0
      %587 = vmatprep.mubr.bf16.mxu0 0
      %588 = vmatmul.mubr.bf16.gmra.mxu0 %v298
      %v589 = vpop.f32.mrf.mxu0
      %v590 = vadd.f32 %v541, %v589
      %v591 = vpop.f32.mrf.mxu0
      %v592 = vpop.f32.mrf.mxu0
      %v593 = vadd.f32 %v544, %v592
      %v594 = vpop.f32.mrf.mxu0
      %595 = vdwg.mxu0
      %v596 = vmax.f32 %v582, 0.0
      %v597 = vmax.f32 %v585, 0.0
      %v598 = vmax.f32 %v590, 0.0
      %v599 = vmax.f32 %v593, 0.0
      %v604 = vrot.slane %v596, 7
      %v605 = vrot.slane %v597, 7
      %v606 = vsel %vm242, %v604, %v605
      %v607 = vrot.slane %v598, 7
      %v608 = vrot.slane %v599, 7
      %v609 = vsel %vm242, %v607, %v608
      %v616 = vsel %vm242, 0.0, %v604
      %v617 = vsel %vm242, 0.0, %v607
      %v618 = vsel %vm242, %v605, 0.0
      %v619 = vsel %vm242, %v608, 0.0
      %v624 = vrot.slane %v616, 1
      %v625 = vrot.slane %v606, 1
      %v626 = vsel %vm263, %v624, %v625
      %v627 = vrot.slane %v618, 1
      %v628 = vsel %vm263, %v625, %v627
      %v629 = vrot.slane %v617, 1
      %v630 = vrot.slane %v609, 1
      %v631 = vsel %vm263, %v629, %v630
      %v632 = vrot.slane %v619, 1
      %v633 = vsel %vm263, %v630, %v632
      %v638 = vrot.slane %v616, 2
      %v639 = vrot.slane %v606, 2
      %v640 = vsel %vm278, %v638, %v639
      %v641 = vrot.slane %v618, 2
      %v642 = vsel %vm278, %v639, %v641
      %v643 = vrot.slane %v617, 2
      %v644 = vrot.slane %v609, 2
      %v645 = vsel %vm278, %v643, %v644
      %v646 = vrot.slane %v619, 2
      %v647 = vsel %vm278, %v644, %v646
      %v652 = vpack.c.bf16 %v606, %v616
      %v653 = vpack.c.bf16 %v628, %v626
      %v654 = vpack.c.bf16 %v642, %v640
      %v655 = vpack.c.bf16 %v609, %v617
      %v656 = vpack.c.bf16 %v633, %v631
      %v657 = vpack.c.bf16 %v647, %v645
      %v658 = vld [vmem:[%s3] sm:$0xf]
      %v659 = vld [vmem:[%s3 + $0x4] sm:$0xf]
      %v660 = vld [vmem:[%s3 + $0x8] sm:$0xf]
      %v661 = vld [vmem:[%s3 + $0xc] sm:$0xf]
      %v662 = vld [vmem:[%s3 + $0x10] sm:$0xf]
      %v663 = vld [vmem:[%s3 + $0x14] sm:$0xf]
      %v664 = vld [vmem:[%s3 + $0x18] sm:$0xf]
      %v665 = vld [vmem:[%s3 + $0x1c] sm:$0xf]
      %v666 = vld [vmem:[%s3 + $0x20] sm:$0xf]
      %v667 = vld [vmem:[%s3 + $0x24] sm:$0xf]
      %v668 = vld [vmem:[%s3 + $0x28] sm:$0xf]
      %v669 = vld [vmem:[%s3 + $0x2c] sm:$0xf]
      %v670 = vld [vmem:[%s3 + $0x30] sm:$0xf]
      %v671 = vld [vmem:[%s3 + $0x34] sm:$0xf]
      %v672 = vld [vmem:[%s3 + $0x38] sm:$0xf]
      %v673 = vld [vmem:[%s3 + $0x3c] sm:$0xf]
      %v674 = vld [vmem:[%s3 + $0x40] sm:$0xf]
      %v675 = vld [vmem:[%s3 + $0x44] sm:$0xf]
      %v676 = vld [vmem:[%s3 + $0x48] sm:$0xf]
      %v677 = vld [vmem:[%s3 + $0x4c] sm:$0xf]
      %v678 = vld [vmem:[%s3 + $0x50] sm:$0xf]
      %v679 = vld [vmem:[%s3 + $0x54] sm:$0xf]
      %v680 = vld [vmem:[%s3 + $0x58] sm:$0xf]
      %v681 = vld [vmem:[%s3 + $0x5c] sm:$0xf]
      %v682 = vld [vmem:[%s3 + $0x60] sm:$0xf]
      %v683 = vld [vmem:[%s3 + $0x64] sm:$0xf]
      %v684 = vld [vmem:[%s3 + $0x68] sm:$0xf]
      %v685 = vld [vmem:[%s3 + $0x6c] sm:$0xf]
      %v686 = vld [vmem:[%s3 + $0x70] sm:$0xf]
      %v687 = vld [vmem:[%s3 + $0x74] sm:$0xf]
      %v688 = vld [vmem:[%s3 + $0x78] sm:$0xf]
      %v689 = vld [vmem:[%s3 + $0x7c] sm:$0xf]
      %v690 = vld [vmem:[%s3 + $0x80] sm:$0xf]
      %v691 = vld [vmem:[%s3 + $0x84] sm:$0xf]
      %v692 = vld [vmem:[%s3 + $0x88] sm:$0xf]
      %v693 = vld [vmem:[%s3 + $0x8c] sm:$0xf]
      %v694 = vld [vmem:[%s3 + $0x90] sm:$0xf]
      %v695 = vld [vmem:[%s3 + $0x94] sm:$0xf]
      %v696 = vld [vmem:[%s3 + $0x98] sm:$0xf]
      %v697 = vld [vmem:[%s3 + $0x9c] sm:$0xf]
      %v698 = vld [vmem:[%s3 + $0xa0] sm:$0xf]
      %v699 = vld [vmem:[%s3 + $0xa4] sm:$0xf]
      %v700 = vld [vmem:[%s3 + $0xa8] sm:$0xf]
      %v701 = vld [vmem:[%s3 + $0xac] sm:$0xf]
      %v702 = vld [vmem:[%s3 + $0xb0] sm:$0xf]
      %v703 = vld [vmem:[%s3 + $0xb4] sm:$0xf]
      %v704 = vld [vmem:[%s3 + $0xb8] sm:$0xf]
      %v705 = vld [vmem:[%s3 + $0xbc] sm:$0xf]
      %v706 = vld [vmem:[%s4] sm:$0x1]
      %v708 = vlaneseq
      %v709 = vshrl.u32 %v708, 7
      %v710 = vsub.s32 0, %v709
      %v711 = vrot.slane %v706, %v710
      %v761 = vunpack.c.l.b16 %v658
      %v762 = vunpack.c.l.b16 %v659
      %v763 = vunpack.c.l.b16 %v660
      %v764 = vunpack.c.l.b16 %v661
      %v765 = vunpack.c.l.b16 %v662
      %v766 = vunpack.c.l.b16 %v663
      %v767 = vunpack.c.l.b16 %v664
      %v768 = vunpack.c.l.b16 %v665
      %v769 = vunpack.c.l.b16 %v666
      %v770 = vunpack.c.l.b16 %v667
      %v771 = vunpack.c.l.b16 %v668
      %v772 = vunpack.c.l.b16 %v669
      %v773 = vunpack.c.l.b16 %v670
      %v774 = vunpack.c.l.b16 %v671
      %v775 = vunpack.c.l.b16 %v672
      %v776 = vunpack.c.l.b16 %v673
      %v777 = vunpack.c.l.b16 %v674
      %v778 = vunpack.c.l.b16 %v675
      %v779 = vunpack.c.l.b16 %v676
      %v780 = vunpack.c.l.b16 %v677
      %v781 = vunpack.c.l.b16 %v678
      %v782 = vunpack.c.l.b16 %v679
      %v783 = vunpack.c.l.b16 %v680
      %v784 = vunpack.c.l.b16 %v681
      %v785 = vunpack.c.l.b16 %v682
      %v786 = vunpack.c.l.b16 %v683
      %v787 = vunpack.c.l.b16 %v684
      %v788 = vunpack.c.l.b16 %v685
      %v789 = vunpack.c.l.b16 %v686
      %v790 = vunpack.c.l.b16 %v687
      %v791 = vunpack.c.l.b16 %v688
      %v792 = vunpack.c.l.b16 %v689
      %v793 = vunpack.c.l.b16 %v690
      %v794 = vunpack.c.l.b16 %v691
      %v795 = vunpack.c.l.b16 %v692
      %v796 = vunpack.c.l.b16 %v693
      %v797 = vunpack.c.l.b16 %v694
      %v798 = vunpack.c.l.b16 %v695
      %v799 = vunpack.c.l.b16 %v696
      %v800 = vunpack.c.l.b16 %v697
      %v801 = vunpack.c.l.b16 %v698
      %v802 = vunpack.c.l.b16 %v699
      %v803 = vunpack.c.l.b16 %v700
      %v804 = vunpack.c.l.b16 %v701
      %v805 = vunpack.c.l.b16 %v702
      %v806 = vunpack.c.l.b16 %v703
      %v807 = vunpack.c.l.b16 %v704
      %v808 = vunpack.c.l.b16 %v705
      %v809 = vpack.c.b16 %v762, %v761
      %v810 = vpack.c.b16 %v764, %v763
      %v811 = vpack.c.b16 %v766, %v765
      %v812 = vpack.c.b16 %v768, %v767
      %v813 = vpack.c.b16 %v770, %v769
      %v814 = vpack.c.b16 %v772, %v771
      %v815 = vpack.c.b16 %v774, %v773
      %v816 = vpack.c.b16 %v776, %v775
      %v817 = vpack.c.b16 %v778, %v777
      %v818 = vpack.c.b16 %v780, %v779
      %v819 = vpack.c.b16 %v782, %v781
      %v820 = vpack.c.b16 %v784, %v783
      %v821 = vpack.c.b16 %v786, %v785
      %v822 = vpack.c.b16 %v788, %v787
      %v823 = vpack.c.b16 %v790, %v789
      %v824 = vpack.c.b16 %v792, %v791
      %v825 = vpack.c.b16 %v794, %v793
      %v826 = vpack.c.b16 %v796, %v795
      %v827 = vpack.c.b16 %v798, %v797
      %v828 = vpack.c.b16 %v800, %v799
      %v829 = vpack.c.b16 %v802, %v801
      %v830 = vpack.c.b16 %v804, %v803
      %v831 = vpack.c.b16 %v806, %v805
      %v832 = vpack.c.b16 %v808, %v807
      %857 = vmatprep.subr.bf16.mxu0 0
      %858 = vmatpush1.bf16.msra.mxu0 %v816
      %859 = vmatprep.subr.bf16.mxu0 0
      %860 = vmatpush1.bf16.msra.mxu0 %v815
      %861 = vmatprep.subr.bf16.mxu0 0
      %862 = vmatpush1.bf16.msra.mxu0 %v814
      %863 = vmatprep.subr.bf16.mxu0 0
      %864 = vmatpush1.bf16.msra.mxu0 %v813
      %865 = vmatprep.subr.bf16.mxu0 0
      %866 = vmatpush1.bf16.msra.mxu0 %v812
      %867 = vmatprep.subr.bf16.mxu0 0
      %868 = vmatpush1.bf16.msra.mxu0 %v811
      %869 = vmatprep.subr.bf16.mxu0 0
      %870 = vmatpush1.bf16.msra.mxu0 %v810
      %871 = vmatprep.subr.bf16.mxu0 0
      %872 = vmatpush1.bf16.msra.mxu0 %v809
      %873 = vmatprep.subr.bf16.mxu0 0
      %874 = vmatpush2.bf16.msra.mxu0 %v824
      %875 = vmatprep.subr.bf16.mxu0 0
      %876 = vmatpush2.bf16.msra.mxu0 %v823
      %877 = vmatprep.subr.bf16.mxu0 0
      %878 = vmatpush2.bf16.msra.mxu0 %v822
      %879 = vmatprep.subr.bf16.mxu0 0
      %880 = vmatpush2.bf16.msra.mxu0 %v821
      %881 = vmatprep.subr.bf16.mxu0 0
      %882 = vmatpush2.bf16.msra.mxu0 %v820
      %883 = vmatprep.subr.bf16.mxu0 0
      %884 = vmatpush2.bf16.msra.mxu0 %v819
      %885 = vmatprep.subr.bf16.mxu0 0
      %886 = vmatpush2.bf16.msra.mxu0 %v818
      %887 = vmatprep.subr.bf16.mxu0 0
      %888 = vmatpush2.bf16.msra.mxu0 %v817
      %889 = vmatprep.mubr.bf16.mxu0 %v653
      %890 = vmatmul.mubr.bf16.gmra.mxu0 %v652
      %v891 = vpop.f32.mrf.mxu0
      %v892 = vadd.f32 %v711, %v891
      %v893 = vpop.f32.mrf.mxu0
      %v894 = vpop.f32.mrf.mxu0
      %v895 = vadd.f32 %v711, %v894
      %v896 = vpop.f32.mrf.mxu0
      %897 = vmatprep.mubr.bf16.mxu0 %v656
      %898 = vmatmul.mubr.bf16.gmra.mxu0 %v655
      %v899 = vpop.f32.mrf.mxu0
      %v900 = vadd.f32 %v711, %v899
      %v901 = vpop.f32.mrf.mxu0
      %v902 = vpop.f32.mrf.mxu0
      %v903 = vadd.f32 %v711, %v902
      %v904 = vpop.f32.mrf.mxu0
      %905 = vdwg.mxu0
      %906 = vmatprep.subr.bf16.mxu0 0
      %907 = vmatpush1.bf16.msra.mxu0 %v832
      %908 = vmatprep.subr.bf16.mxu0 0
      %909 = vmatpush1.bf16.msra.mxu0 %v831
      %910 = vmatprep.subr.bf16.mxu0 0
      %911 = vmatpush1.bf16.msra.mxu0 %v830
      %912 = vmatprep.subr.bf16.mxu0 0
      %913 = vmatpush1.bf16.msra.mxu0 %v829
      %914 = vmatprep.subr.bf16.mxu0 0
      %915 = vmatpush1.bf16.msra.mxu0 %v828
      %916 = vmatprep.subr.bf16.mxu0 0
      %917 = vmatpush1.bf16.msra.mxu0 %v827
      %918 = vmatprep.subr.bf16.mxu0 0
      %919 = vmatpush1.bf16.msra.mxu0 %v826
      %920 = vmatprep.subr.bf16.mxu0 0
      %921 = vmatpush1.bf16.msra.mxu0 %v825
      %922 = vmatprep.subr.bf16.mxu0 0
      %923 = vmatpush2.bf16.msra.mxu0 0
      %924 = vmatprep.subr.bf16.mxu0 0
      %925 = vmatpush2.bf16.msra.mxu0 0
      %926 = vmatprep.subr.bf16.mxu0 0
      %927 = vmatpush2.bf16.msra.mxu0 0
      %928 = vmatprep.subr.bf16.mxu0 0
      %929 = vmatpush2.bf16.msra.mxu0 0
      %930 = vmatprep.subr.bf16.mxu0 0
      %931 = vmatpush2.bf16.msra.mxu0 0
      %932 = vmatprep.subr.bf16.mxu0 0
      %933 = vmatpush2.bf16.msra.mxu0 0
      %934 = vmatprep.subr.bf16.mxu0 0
      %935 = vmatpush2.bf16.msra.mxu0 0
      %936 = vmatprep.subr.bf16.mxu0 0
      %937 = vmatpush2.bf16.msra.mxu0 0
      %938 = vmatprep.mubr.bf16.mxu0 0
      %939 = vmatmul.mubr.bf16.gmra.mxu0 %v654
      %v940 = vpop.f32.mrf.mxu0
      %v941 = vadd.f32 %v892, %v940
      %v942 = vpop.f32.mrf.mxu0
      %v943 = vpop.f32.mrf.mxu0
      %v944 = vadd.f32 %v895, %v943
      %v945 = vpop.f32.mrf.mxu0
      %946 = vmatprep.mubr.bf16.mxu0 0
      %947 = vmatmul.mubr.bf16.gmra.mxu0 %v657
      %v948 = vpop.f32.mrf.mxu0
      %v949 = vadd.f32 %v900, %v948
      %v950 = vpop.f32.mrf.mxu0
      %v951 = vpop.f32.mrf.mxu0
      %v952 = vadd.f32 %v903, %v951
      %v953 = vpop.f32.mrf.mxu0
      %954 = vdwg.mxu0
      %v955 = vadd.f32 %v941, %v234
      %v956 = vadd.f32 %v944, %v235
      %v957 = vadd.f32 %v949, %v236
      %v958 = vadd.f32 %v952, %v237
      %v959 = vmax.f32 %v955, 0.0
      %v960 = vmax.f32 %v956, 0.0
      %v961 = vmax.f32 %v957, 0.0
      %v962 = vmax.f32 %v958, 0.0
      %963 = vst [vmem:[%s231] sm:$0xff] %v959
      %964 = vst [vmem:[%s231 + $0x8] sm:$0xff] %v960
      %965 = vst [vmem:[%s231 + $0x10] sm:$0xff] %v961
      %966 = vst [vmem:[%s231 + $0x18] sm:$0xff] %v962
      %s967 = smul.u32 2, %s16
      %p968 = scmp.lt.s32.totalorder %s967, 15
      %s969 = scalar_select %p968, %s967, 15
      %s970 = smul.addr %s969, 2
      %s971 = smul.addr %s970, 8
      %s972 = scalar_lea.vmem %s5, %s971
      // Predicated region
      $region41: #{basic_block_forward.1} parent=39 // pred_check
        %p973 = pneg %p144
      $region42: #{basic_block_forward.1} parent=39 // pred_check_branch
        %975 = sbr.rel (%p973) target = $region44
      $region43: #{basic_block_forward.1} parent=39 // pred_region
        %s976 = smul.u32 2, %s16
      $region44: #{basic_block_forward.1} parent=39 // pred_fallthru
        _
    $region40: #{basic_block_forward.1} parent=5 // pred_fallthru
      _
    %p977 = scmp.le.s32.totalorder 2, %s11
    // Predicated region
    $region45: #{basic_block_forward.1} parent=5 // pred_check
      %p978 = pneg %p977
    $region46: #{basic_block_forward.1} parent=5 // pred_check_branch
      %980 = sbr.rel (%p978) target = $region48
    $region47: #{basic_block_forward.1} parent=5 // pred_region
      %s981 = ssub.s32 %s11, 2
      // Predicated region
      $region49: #{basic_block_forward.1} parent=47 // pred_check
        %p982 = pneg %p150
      $region50: #{basic_block_forward.1} parent=47 // pred_check_branch
        %984 = sbr.rel (%p982) target = $region52
      $region51: #{basic_block_forward.1} parent=47 // pred_region
        %s985 = smul.u32 2, %s17
        %p986 = scmp.lt.s32.totalorder %s985, 15
        %s987 = scalar_select %p986, %s985, 15
        %s988 = smul.addr %s987, 2
        %s989 = smul.addr %s988, 8
        %s990 = scalar_lea.vmem %s5, %s989
      $region52: #{basic_block_forward.1} parent=47 // pred_fallthru
        _
    $region48: #{basic_block_forward.1} parent=5 // pred_fallthru
      _
  $region6: #{basic_block_forward.1} parent=0 // loop_footer
    %s15 = sadd.s32 1, %s11
  $region7: #{basic_block_forward.1} parent=0 // loop_footer_branch
    %10 = sbr.rel target = $region3
  $region8: #{basic_block_forward.1} parent=0 // loop_exit
    _

</llo_original>
